<compile_context>
chip_gen: v6e
topology: v6e:2x2x1
jax: 0.10.0
libtpu: 0.0.40
codegen_flags: <defaults>
</compile_context>

<pallas_src>
import functools
import math

import jax
import jax.numpy as jnp
from jax.experimental import pallas as pl
from jax.experimental.pallas import tpu as pltpu


def _round_up(a: int, b: int) -> int:
    return (a + b - 1) // b * b


def _kv_quant_dequant_kernel(x_ref, o_ref, *, bits: int, clip_ratio,
                             group_dim: int, groups_per_row: int):
    x = x_ref[...].astype(jnp.float32)            # (tr, L), L = gpr * d
    tr, L = x.shape
    max_int = jnp.float32(2 ** bits - 1)
    neg_inf = jnp.float32(-jnp.inf)
    pos_inf = jnp.float32(jnp.inf)

    if groups_per_row == 1:
        # Fast path: the reduction dim is the whole row.
        xmax = jnp.max(x, axis=-1, keepdims=True)
        xmin = jnp.min(x, axis=-1, keepdims=True)
    else:
        # Packed path: `groups_per_row` independent groups of width
        # `group_dim` live side-by-side in each lane-dense (mult-of-128) row.
        # Per group: one compare, two masked XLU reductions, two where
        # scatters.  Everything else (clip/scale/inv/offset) is done
        # full-width once after the loop.
        lane = jax.lax.broadcasted_iota(jnp.int32, (tr, L), 1)
        gid = lane // group_dim                    # cheap: d is a power of 2
        xmax = jnp.full((tr, L), neg_inf, jnp.float32)
        xmin = jnp.full((tr, L), pos_inf, jnp.float32)
        for g in range(groups_per_row):            # small static unroll
            m = gid == g
            xmax_g = jnp.max(jnp.where(m, x, neg_inf), axis=-1, keepdims=True)
            xmin_g = jnp.min(jnp.where(m, x, pos_inf), axis=-1, keepdims=True)
            xmax = jnp.where(m, xmax_g, xmax)
            xmin = jnp.where(m, xmin_g, xmin)

    if clip_ratio is not None:
        xmax = xmax * jnp.float32(clip_ratio)
        xmin = xmin * jnp.float32(clip_ratio)
    rng = jnp.maximum(xmax - xmin, jnp.float32(1e-5))
    scale = rng / max_int
    inv_scale = 1.0 / scale                        # hoisted reciprocal
    offset = jnp.round(-xmin * inv_scale)          # integer-valued float

    # Offset folded into the clip bounds (exact: all integer-valued floats).
    q = jnp.clip(jnp.round(x * inv_scale), -offset, max_int - offset)
    o_ref[...] = (q * scale).astype(o_ref.dtype)


def kv_quantize_dequantize(
    x: jax.Array,
    bits: int,
    *,
    clip_ratio: float | None = None,
    groupsize: int | None = None,
    quantile: float | None = None,
    row_tile: int | None = None,
) -> jax.Array:
    """Quantize + dequantize x head-wise (asymmetric RTN) with a Pallas kernel."""
    if quantile is not None:
        # TODO(synk): quantile clipping requires sort/selection; unsupported.
        raise NotImplementedError("quantile clipping not supported in the kernel")

    orig_shape = x.shape
    orig_dtype = x.dtype
    d = orig_shape[-1]
    if groupsize is not None:
        assert d % groupsize == 0
        d = groupsize

    x2 = x.reshape(-1, d)                      # (rows, reduction_dim); free reshape
    rows = x2.shape[0]
    itemsize = jnp.dtype(orig_dtype).itemsize

    # Lane-dense packing: gpr groups per row so the block's last dim is a
    # multiple of 128 (unmasked full-width stores).  Only used when it needs
    # no padding (rows % gpr == 0) and the per-group unroll stays small;
    # otherwise fall back to an unpacked full-extent last dim (no extra HBM
    # pad/slice passes -- the rare misaligned case just gets masked stores).
    gpr = 128 // math.gcd(d, 128)
    if gpr > 1 and rows % gpr == 0 and gpr <= 8:
        packed_rows = rows // gpr
        L = d * gpr
        x_kernel = x2.reshape(packed_rows, L)  # free reshape (contiguous)
        kernel_gpr = gpr
    else:
        packed_rows = rows
        L = d
        x_kernel = x2
        kernel_gpr = 1

    # Row tile from a per-block BYTE budget (I/O dtype).  ~2 MiB blocks sit at
    # the measured >=85% of HBM roofline knee; the packed path gets ~1 MiB
    # because its in-kernel f32 working set (iota, gid, xmin/xmax, temps) is
    # several x block size.  Double-buffered I/O (2 specs x 2 bufs x block) +
    # temporaries stay well under the 48 MiB vmem limit below on all of
    # v5e/v6e/v7x.
    if row_tile is None:
        budget_bytes = (2 << 20) if kernel_gpr == 1 else (1 << 20)
        tr = max(budget_bytes // (L * itemsize), 1)
    else:
        tr = max(int(row_tile), 1)
    tr = max((tr // 32) * 32, 32)              # sublane granule (f32/bf16/int8)
    # Keep >= ~4 grid steps so ("parallel",) can shard across v7x's 2 TCs.
    if packed_rows >= 4 * 32:
        tr = min(tr, max((packed_rows // 4) // 32 * 32, 32))
    tr = min(tr, _round_up(packed_rows, 32))   # don't exceed the data

    grid = pl.cdiv(packed_rows, tr)            # partial last tile is masked

    kernel = functools.partial(
        _kv_quant_dequant_kernel, bits=bits, clip_ratio=clip_ratio,
        group_dim=d, groups_per_row=kernel_gpr,
    )

    out_flat = pl.pallas_call(
        kernel,
        out_shape=jax.ShapeDtypeStruct((packed_rows, L), orig_dtype),
        grid_spec=pltpu.PrefetchScalarGridSpec(
            num_scalar_prefetch=0,
            grid=(grid,),
            in_specs=[pl.BlockSpec((tr, L), lambda i: (i, 0))],
            out_specs=pl.BlockSpec((tr, L), lambda i: (i, 0)),
        ),
        compiler_params=pltpu.CompilerParams(
            dimension_semantics=("parallel",),
            vmem_limit_bytes=48 * 1024 * 1024,
        ),
        cost_estimate=pl.CostEstimate(
            flops=int((12 + 5 * (kernel_gpr - 1)) * packed_rows * L),
            transcendentals=0,
            bytes_accessed=int(2 * packed_rows * L * itemsize),
        ),
    )(x_kernel)

    return out_flat.reshape(orig_shape)


def _reference(x, bits, clip_ratio=None, groupsize=None):
    """Pure-JAX reference of the same semantics. Returns (out, per-elem step)."""
    orig_shape = x.shape
    xr = x
    if groupsize is not None:
        xr = x.reshape(orig_shape[:-1] + (orig_shape[-1] // groupsize, groupsize))
    xf = xr.astype(jnp.float32)
    max_int = jnp.float32(2 ** bits - 1)
    xmax = jnp.max(xf, axis=-1, keepdims=True)
    xmin = jnp.min(xf, axis=-1, keepdims=True)
    if clip_ratio is not None:
        xmax = xmax * jnp.float32(clip_ratio)
        xmin = xmin * jnp.float32(clip_ratio)
    rng = jnp.maximum(xmax - xmin, jnp.float32(1e-5))
    scale = rng / max_int
    inv_scale = 1.0 / scale
    offset = jnp.round(-xmin * inv_scale)
    q = jnp.clip(jnp.round(xf * inv_scale) + offset, 0.0, max_int)
    out = ((q - offset) * scale).astype(x.dtype).reshape(orig_shape)
    step = jnp.broadcast_to(scale, xf.shape).reshape(orig_shape)
    return out, step


if __name__ == "__main__":
    key = jax.random.PRNGKey(0)
    cases = [
        # (shape,            dtype,        bits, clip_ratio, groupsize)
        ((2, 4, 8, 128), jnp.float32, 4, None, None),   # lane-dense, gpr=1
        ((2, 4, 8, 32),  jnp.float32, 3, 0.95, None),   # packed path, gpr=4
        ((2, 4, 8, 64),  jnp.bfloat16, 4, None, 32),    # bf16 + groupsize
        ((1, 3, 5, 32),  jnp.float32, 4, None, None),   # odd rows -> unpacked fallback
    ]
    for idx, (shape, dtype, bits, clip_ratio, groupsize) in enumerate(cases):
        key, sub = jax.random.split(key)
        x = jax.random.normal(sub, shape, dtype=jnp.float32).astype(dtype)

        out = kv_quantize_dequantize(
            x, bits, clip_ratio=clip_ratio, groupsize=groupsize)
        out = jax.block_until_ready(out)

        ref, step = _reference(x, bits, clip_ratio=clip_ratio, groupsize=groupsize)
        assert out.shape == x.shape and out.dtype == x.dtype

        diff = jnp.abs(out.astype(jnp.float32) - ref.astype(jnp.float32))
        # Expect essentially bit-identical results; tolerate at most a single
        # quantization-step flip on a vanishing fraction of elements
        # (divide-vs-reciprocal lowering at exact rounding boundaries).
        assert bool(jnp.all(diff <= step * 1.001 + 1e-4)), f"case {idx}: >1 LSB error"
        assert float(jnp.mean((diff > 1e-4).astype(jnp.float32))) < 1e-3, \
            f"case {idx}: too many mismatching elements"

    print("KERNEL_OK")
</pallas_src>

<mosaic_0001>
module attributes {stable_mosaic.version = 11 : i64} {
  func.func @_kv_quant_dequant_kernel(%arg0: i32, %arg1: memref<64x128xf32, #tpu.memory_space<vmem>>, %arg2: memref<64x128xf32, #tpu.memory_space<vmem>>) attributes {dimension_semantics = [#tpu.dimension_semantics<parallel>], iteration_bounds = array<i64: 1>, scalar_prefetch = 0 : i64, scratch_operands = 0 : i64, tpu.core_type = #tpu.core_type<tc>, window_params = [{transform_indices = @transform_0, window_bounds = array<i64: 64, 128>}, {transform_indices = @transform_1, window_bounds = array<i64: 64, 128>}]} {
    %c0 = arith.constant 0 : index
    %c0_0 = arith.constant 0 : index
    %0 = vector.load %arg1[%c0, %c0_0] : memref<64x128xf32, #tpu.memory_space<vmem>>, vector<64x128xf32>
    %cst = arith.constant dense<0xFF800000> : vector<64xf32>
    %1 = vector.multi_reduction <maximumf>, %0, %cst [1] : vector<64x128xf32> to vector<64xf32>
    %2 = vector.shape_cast %1 : vector<64xf32> to vector<64x1xf32>
    %cst_1 = arith.constant dense<0x7F800000> : vector<64xf32>
    %3 = vector.multi_reduction <minimumf>, %0, %cst_1 [1] : vector<64x128xf32> to vector<64xf32>
    %4 = vector.shape_cast %3 : vector<64xf32> to vector<64x1xf32>
    %5 = arith.subf %2, %4 : vector<64x1xf32>
    %cst_2 = arith.constant 9.99999974E-6 : f32
    %6 = vector.broadcast %cst_2 : f32 to vector<64x1xf32>
    %7 = arith.maximumf %5, %6 : vector<64x1xf32>
    %cst_3 = arith.constant 1.500000e+01 : f32
    %8 = vector.broadcast %cst_3 : f32 to vector<64x1xf32>
    %9 = arith.divf %7, %8 : vector<64x1xf32>
    %cst_4 = arith.constant 1.000000e+00 : f32
    %10 = vector.broadcast %cst_4 : f32 to vector<64x1xf32>
    %11 = arith.divf %10, %9 : vector<64x1xf32>
    %cst_5 = arith.constant 0.000000e+00 : f32
    %12 = vector.broadcast %cst_5 : f32 to vector<64x1xf32>
    %13 = arith.subf %12, %4 : vector<64x1xf32>
    %14 = arith.mulf %13, %11 : vector<64x1xf32>
    %15 = math.roundeven %14 : vector<64x1xf32>
    %16 = vector.broadcast %11 : vector<64x1xf32> to vector<64x128xf32>
    %17 = arith.mulf %0, %16 : vector<64x128xf32>
    %18 = math.roundeven %17 : vector<64x128xf32>
    %cst_6 = arith.constant 0.000000e+00 : f32
    %19 = vector.broadcast %cst_6 : f32 to vector<64x1xf32>
    %20 = arith.subf %19, %15 : vector<64x1xf32>
    %cst_7 = arith.constant 1.500000e+01 : f32
    %21 = vector.broadcast %cst_7 : f32 to vector<64x1xf32>
    %22 = arith.subf %21, %15 : vector<64x1xf32>
    %23 = vector.broadcast %20 : vector<64x1xf32> to vector<64x128xf32>
    %24 = arith.maximumf %23, %18 : vector<64x128xf32>
    %25 = vector.broadcast %22 : vector<64x1xf32> to vector<64x128xf32>
    %26 = arith.minimumf %25, %24 : vector<64x128xf32>
    %27 = vector.broadcast %9 : vector<64x1xf32> to vector<64x128xf32>
    %28 = arith.mulf %26, %27 : vector<64x128xf32>
    %c0_8 = arith.constant 0 : index
    %c0_9 = arith.constant 0 : index
    %29 = vector.load %arg2[%c0_8, %c0_9] : memref<64x128xf32, #tpu.memory_space<vmem>>, vector<64x128xf32>
    tpu.vector_store %arg2[%c0_8, %c0_9], %28 {strides = array<i32>} : memref<64x128xf32, #tpu.memory_space<vmem>>, vector<64x128xf32>,
    return
  }
  func.func @transform_0(%arg0: i32) -> (i32, i32) {
    %c0_i32 = arith.constant 0 : i32
    %c0_i32_0 = arith.constant 0 : i32
    return %arg0, %c0_i32 : i32, i32
  }
  func.func @transform_1(%arg0: i32) -> (i32, i32) {
    %c0_i32 = arith.constant 0 : i32
    %c0_i32_0 = arith.constant 0 : i32
    return %arg0, %c0_i32 : i32, i32
  }
}

</mosaic_0001>

<llo_original>
// kernel: tpu_custom_call.1
$region0: #{tpu_custom_call.1}
  #allocation0 [shape = 'u32[]', space=smem, size = 0x4, offset = 0x4, fixed_abs, tag = 'smem constant byte address 0x4 - core index']
  #allocation1 [shape = 'u32[144,128]{1,0:T(1,128)}', space=vmem, size = 0x12000, scoped, tag = 'internal scratch']
  %s0 = inlined_call_operand.hbm [shape: f32[64,128], index: 0, kind: input, shape index: {}]
  %s1 = inlined_call_operand.hbm [shape: f32[64,128], index: 1, kind: output, shape index: {}]
  %s2 = sld [smem:[#allocation0]]
  $region18: #{tpu_custom_call.1} parent=0
    _
  %s4 = ssub.s32 1, %s2
  %s5 = scalar_select 0, %s4, %s2
  $region1: #{tpu_custom_call.1} parent=0
    #allocation2 [shape = 'u8[32768]{0}', space=vmem, size = 0x8000, scoped, tag = 'input window, operand 0, single buffered']
    #allocation3 [shape = 's32[1]{0}', space=sflag, size = 0x4, scoped, tag = 'scoped memory for tpu_custom_call.1']
    #allocation4 [shape = 's32[1]{0}', space=sflag, size = 0x4, scoped, tag = 'scoped memory for tpu_custom_call.1']
    #allocation5 [shape = 'u8[32768]{0}', space=vmem, size = 0x8000, scoped, tag = 'output window, operand 0, single buffered']
    %6 = vsyncpa [#allocation3], 0
    %7 = vsyncpa [#allocation4], 0
    // Predicated region
    $region2: #{tpu_custom_call.1} parent=1 // pred_check
      _
    $region3: #{tpu_custom_call.1} parent=1 // pred_check_branch
      %9 = sbr.rel (0) target = $region5
    $region4: #{tpu_custom_call.1} parent=1 // pred_region
      %s11 = ssub.s32 1024, 1024
      %12 = vsyncadd [#allocation3], %s11
      %s13 = sshll.u32 [#allocation2], 4
      %s14 = int_to_ptr.vmem [resolvable:$true] %s13
      %19 = dma.hbm_to_vmem [thread:$0]  %s0, 1024, %s14, [#allocation3], 128, 128, 8
    $region5: #{tpu_custom_call.1} parent=1 // pred_fallthru
      _
    // Predicated region
    $region6: #{tpu_custom_call.1} parent=1 // pred_check
      _
    $region7: #{tpu_custom_call.1} parent=1 // pred_check_branch
      %21 = sbr.rel (0) target = $region9
    $region8: #{tpu_custom_call.1} parent=1 // pred_region
      %22 = dma.done [#allocation3], 1024
    $region9: #{tpu_custom_call.1} parent=1 // pred_fallthru
      _
    %v23 = vld [vmem:[#allocation2] sm:$0xff]
    %v24 = vld [vmem:[#allocation2 + $0x8] sm:$0xff]
    %v25 = vld [vmem:[#allocation2 + $0x10] sm:$0xff]
    %v26 = vld [vmem:[#allocation2 + $0x18] sm:$0xff]
    %v27 = vld [vmem:[#allocation2 + $0x20] sm:$0xff]
    %v28 = vld [vmem:[#allocation2 + $0x28] sm:$0xff]
    %v29 = vld [vmem:[#allocation2 + $0x30] sm:$0xff]
    %v30 = vld [vmem:[#allocation2 + $0x38] sm:$0xff]
    %31 = vmax.xlane.f32.xlu0 %v23
    %v32 = vpop.xlane.xlu0 %31
    %33 = vmax.xlane.f32.xlu0 %v24
    %v34 = vpop.xlane.xlu0 %33
    %35 = vmax.xlane.f32.xlu0 %v25
    %v36 = vpop.xlane.xlu0 %35
    %37 = vmax.xlane.f32.xlu0 %v26
    %v38 = vpop.xlane.xlu0 %37
    %39 = vmax.xlane.f32.xlu0 %v27
    %v40 = vpop.xlane.xlu0 %39
    %41 = vmax.xlane.f32.xlu0 %v28
    %v42 = vpop.xlane.xlu0 %41
    %43 = vmax.xlane.f32.xlu0 %v29
    %v44 = vpop.xlane.xlu0 %43
    %45 = vmax.xlane.f32.xlu0 %v30
    %v46 = vpop.xlane.xlu0 %45
    %47 = vmin.xlane.f32.xlu0 %v23
    %v48 = vpop.xlane.xlu0 %47
    %49 = vmin.xlane.f32.xlu0 %v24
    %v50 = vpop.xlane.xlu0 %49
    %51 = vmin.xlane.f32.xlu0 %v25
    %v52 = vpop.xlane.xlu0 %51
    %53 = vmin.xlane.f32.xlu0 %v26
    %v54 = vpop.xlane.xlu0 %53
    %55 = vmin.xlane.f32.xlu0 %v27
    %v56 = vpop.xlane.xlu0 %55
    %57 = vmin.xlane.f32.xlu0 %v28
    %v58 = vpop.xlane.xlu0 %57
    %59 = vmin.xlane.f32.xlu0 %v29
    %v60 = vpop.xlane.xlu0 %59
    %61 = vmin.xlane.f32.xlu0 %v30
    %v62 = vpop.xlane.xlu0 %61
    %v63 = vsub.f32 %v32, %v48
    %v64 = vsub.f32 %v34, %v50
    %v65 = vsub.f32 %v36, %v52
    %v66 = vsub.f32 %v38, %v54
    %v67 = vsub.f32 %v40, %v56
    %v68 = vsub.f32 %v42, %v58
    %v69 = vsub.f32 %v44, %v60
    %v70 = vsub.f32 %v46, %v62
    %v71 = vmax.f32 %v63, 1e-05
    %v72 = vmax.f32 %v64, 1e-05
    %v73 = vmax.f32 %v65, 1e-05
    %v74 = vmax.f32 %v66, 1e-05
    %v75 = vmax.f32 %v67, 1e-05
    %v76 = vmax.f32 %v68, 1e-05
    %v77 = vmax.f32 %v69, 1e-05
    %v78 = vmax.f32 %v70, 1e-05
    %v79 = vrcp.pop 15.0
    %v80 = vmul.f32 %v71, %v79
    %v81 = vmul.f32 %v72, %v79
    %v82 = vmul.f32 %v73, %v79
    %v83 = vmul.f32 %v74, %v79
    %v84 = vmul.f32 %v75, %v79
    %v85 = vmul.f32 %v76, %v79
    %v86 = vmul.f32 %v77, %v79
    %v87 = vmul.f32 %v78, %v79
    %v88 = vrcp.pop %v80
    %v89 = vmul.f32 1.0, %v88
    %v90 = vrcp.pop %v81
    %v91 = vmul.f32 1.0, %v90
    %v92 = vrcp.pop %v82
    %v93 = vmul.f32 1.0, %v92
    %v94 = vrcp.pop %v83
    %v95 = vmul.f32 1.0, %v94
    %v96 = vrcp.pop %v84
    %v97 = vmul.f32 1.0, %v96
    %v98 = vrcp.pop %v85
    %v99 = vmul.f32 1.0, %v98
    %v100 = vrcp.pop %v86
    %v101 = vmul.f32 1.0, %v100
    %v102 = vrcp.pop %v87
    %v103 = vmul.f32 1.0, %v102
    %v104 = vsub.f32 0.0, %v48
    %v105 = vsub.f32 0.0, %v50
    %v106 = vsub.f32 0.0, %v52
    %v107 = vsub.f32 0.0, %v54
    %v108 = vsub.f32 0.0, %v56
    %v109 = vsub.f32 0.0, %v58
    %v110 = vsub.f32 0.0, %v60
    %v111 = vsub.f32 0.0, %v62
    %v112 = vmul.f32 %v104, %v89
    %v113 = vmul.f32 %v105, %v91
    %v114 = vmul.f32 %v106, %v93
    %v115 = vmul.f32 %v107, %v95
    %v116 = vmul.f32 %v108, %v97
    %v117 = vmul.f32 %v109, %v99
    %v118 = vmul.f32 %v110, %v101
    %v119 = vmul.f32 %v111, %v103
    %v120 = vround.ne.pseudo %v112
    %v121 = vround.ne.pseudo %v113
    %v122 = vround.ne.pseudo %v114
    %v123 = vround.ne.pseudo %v115
    %v124 = vround.ne.pseudo %v116
    %v125 = vround.ne.pseudo %v117
    %v126 = vround.ne.pseudo %v118
    %v127 = vround.ne.pseudo %v119
    %v128 = vmul.f32 %v23, %v89
    %v129 = vmul.f32 %v24, %v91
    %v130 = vmul.f32 %v25, %v93
    %v131 = vmul.f32 %v26, %v95
    %v132 = vmul.f32 %v27, %v97
    %v133 = vmul.f32 %v28, %v99
    %v134 = vmul.f32 %v29, %v101
    %v135 = vmul.f32 %v30, %v103
    %v136 = vround.ne.pseudo %v128
    %v137 = vround.ne.pseudo %v129
    %v138 = vround.ne.pseudo %v130
    %v139 = vround.ne.pseudo %v131
    %v140 = vround.ne.pseudo %v132
    %v141 = vround.ne.pseudo %v133
    %v142 = vround.ne.pseudo %v134
    %v143 = vround.ne.pseudo %v135
    %v144 = vsub.f32 0.0, %v120
    %v145 = vsub.f32 0.0, %v121
    %v146 = vsub.f32 0.0, %v122
    %v147 = vsub.f32 0.0, %v123
    %v148 = vsub.f32 0.0, %v124
    %v149 = vsub.f32 0.0, %v125
    %v150 = vsub.f32 0.0, %v126
    %v151 = vsub.f32 0.0, %v127
    %v152 = vsub.f32 15.0, %v120
    %v153 = vsub.f32 15.0, %v121
    %v154 = vsub.f32 15.0, %v122
    %v155 = vsub.f32 15.0, %v123
    %v156 = vsub.f32 15.0, %v124
    %v157 = vsub.f32 15.0, %v125
    %v158 = vsub.f32 15.0, %v126
    %v159 = vsub.f32 15.0, %v127
    %v160 = vmax.f32 %v144, %v136
    %v161 = vmax.f32 %v145, %v137
    %v162 = vmax.f32 %v146, %v138
    %v163 = vmax.f32 %v147, %v139
    %v164 = vmax.f32 %v148, %v140
    %v165 = vmax.f32 %v149, %v141
    %v166 = vmax.f32 %v150, %v142
    %v167 = vmax.f32 %v151, %v143
    %v168 = vmin.f32 %v152, %v160
    %v169 = vmin.f32 %v153, %v161
    %v170 = vmin.f32 %v154, %v162
    %v171 = vmin.f32 %v155, %v163
    %v172 = vmin.f32 %v156, %v164
    %v173 = vmin.f32 %v157, %v165
    %v174 = vmin.f32 %v158, %v166
    %v175 = vmin.f32 %v159, %v167
    %v176 = vmul.f32 %v168, %v80
    %v177 = vmul.f32 %v169, %v81
    %v178 = vmul.f32 %v170, %v82
    %v179 = vmul.f32 %v171, %v83
    %v180 = vmul.f32 %v172, %v84
    %v181 = vmul.f32 %v173, %v85
    %v182 = vmul.f32 %v174, %v86
    %v183 = vmul.f32 %v175, %v87
    %184 = vst [vmem:[#allocation5] sm:$0xff] %v176
    %185 = vst [vmem:[#allocation5 + $0x8] sm:$0xff] %v177
    %186 = vst [vmem:[#allocation5 + $0x10] sm:$0xff] %v178
    %187 = vst [vmem:[#allocation5 + $0x18] sm:$0xff] %v179
    %188 = vst [vmem:[#allocation5 + $0x20] sm:$0xff] %v180
    %189 = vst [vmem:[#allocation5 + $0x28] sm:$0xff] %v181
    %190 = vst [vmem:[#allocation5 + $0x30] sm:$0xff] %v182
    %191 = vst [vmem:[#allocation5 + $0x38] sm:$0xff] %v183
    // Predicated region
    $region10: #{tpu_custom_call.1} parent=1 // pred_check
      _
    $region11: #{tpu_custom_call.1} parent=1 // pred_check_branch
      %193 = sbr.rel (0) target = $region13
    $region12: #{tpu_custom_call.1} parent=1 // pred_region
      %s195 = ssub.s32 1024, 1024
      %196 = vsyncadd [#allocation4], %s195
      %s197 = sshll.u32 [#allocation5], 4
      %s198 = int_to_ptr.vmem [resolvable:$true] %s197
      %203 = dma.vmem_to_hbm [thread:$0]  %s198, 1024, %s1, [#allocation4], 128, 128, 8
    $region13: #{tpu_custom_call.1} parent=1 // pred_fallthru
      _
    // Predicated region
    $region14: #{tpu_custom_call.1} parent=1 // pred_check
      _
    $region15: #{tpu_custom_call.1} parent=1 // pred_check_branch
      %205 = sbr.rel (0) target = $region17
    $region16: #{tpu_custom_call.1} parent=1 // pred_region
      %206 = dma.done [#allocation4], 1024
    $region17: #{tpu_custom_call.1} parent=1 // pred_fallthru
      _
    %207 = vsyncpa [#allocation3], 1
    %208 = vsyncpa [#allocation4], 1

</llo_original>
